<compile_context>
chip_gen: v7x
topology: tpu7x:2x2x1
jax: 0.10.0
libtpu: 0.0.40
codegen_flags: <defaults>
</compile_context>

<pallas_src>
import math

import jax
import jax.numpy as jnp
import numpy as np
from jax.experimental import pallas as pl
from jax.experimental.pallas import tpu as pltpu


# ---------------------------------------------------------------------------
# Kernel
# ---------------------------------------------------------------------------
def convtranspose_bn_silu_kernel(x_ref, w_ref, shift_ref, o_ref):
    # x_ref: (tm, C1)  w_ref: (C1, tn)  shift_ref: (1, tn)  o_ref: (tm, tn)
    y = jnp.dot(x_ref[...], w_ref[...], preferred_element_type=jnp.float32)
    y = y + shift_ref[...]                                   # folded BatchNorm shift
    # exact SiLU: y * sigmoid(y) == y / (1 + exp(-y)); kernel is mem-bound so the
    # extra EUP op is free and we avoid the approx-reciprocal accuracy loss.
    o_ref[...] = (y / (1.0 + jnp.exp(-y))).astype(o_ref.dtype)


# ---------------------------------------------------------------------------
# VMEM / tile-size heuristics
# ---------------------------------------------------------------------------
def _round_up(x, m):
    return (x + m - 1) // m * m


def _vmem_block_bytes(rows, cols, dtype):
    """Bytes one (rows, cols) block actually occupies in VMEM ((8*pack,128) tiling)."""
    itemsize = jnp.dtype(dtype).itemsize
    sublane = 8 * (4 // itemsize)            # f32: 8, bf16: 16, int8: 32
    return _round_up(max(rows, 1), sublane) * _round_up(max(cols, 1), 128) * itemsize


def _vmem_budgets():
    """(tiling_budget_bytes, vmem_limit_bytes), generation-aware."""
    cap = None
    try:
        cap = getattr(pltpu.get_tpu_info(), "vmem_capacity_bytes", None)
    except Exception:
        cap = None
    if cap is None:
        cap = 64 * 1024 * 1024               # conservative default (v7x-sized)
    if cap >= 96 * 1024 * 1024:              # v5e / v6e: 128 MiB per TensorCore
        return 72 * 1024 * 1024, 96 * 1024 * 1024
    return 26 * 1024 * 1024, 40 * 1024 * 1024   # v7x: 64 MiB per TensorCore


def _select_tiles(M, c_in, cols, dot_dtype, out_dtype, budget):
    """Pick (tm, tn): largest tiles that fit the VMEM budget, preferring an even
    number of row steps (v7x megacore sharding of the 'parallel' axis)."""
    # Column tile: keep the whole scaled weight resident when it fits; otherwise
    # halve (staying a multiple of 128) so a huge weight cannot blow v7x VMEM.
    tn_cands = [cols]
    d = cols
    while d % 256 == 0:
        d //= 2
        tn_cands.append(d)
    tn = tn_cands[-1]
    for cand in tn_cands:
        w_cost = (2 * _vmem_block_bytes(c_in, cand, dot_dtype)
                  + 2 * _vmem_block_bytes(1, cand, jnp.float32))
        if w_cost <= budget // 2:
            tn = cand
            break

    row_cap = _round_up(M, 16)
    tm_cands = [t for t in (8192, 4096, 2048, 1024, 512, 256, 128, 64, 32, 16)
                if t <= row_cap] or [16]

    def fits(tm):
        used = (2 * _vmem_block_bytes(tm, c_in, dot_dtype)       # x tile (double-buffered)
                + 2 * _vmem_block_bytes(c_in, tn, dot_dtype)     # weight (double-buffered)
                + 2 * _vmem_block_bytes(1, tn, jnp.float32)      # shift
                + 2 * _vmem_block_bytes(tm, tn, out_dtype)       # out tile (double-buffered)
                + _vmem_block_bytes(tm, tn, jnp.float32))        # f32 dot intermediate
        return used <= budget

    best = None
    for tm in tm_cands:
        if not fits(tm):
            continue
        if best is None:
            best = tm
        steps = -(-M // tm)
        if steps == 1 or steps % 2 == 0:
            return tm, tn
    return (best if best is not None else tm_cands[-1]), tn


# ---------------------------------------------------------------------------
# Wrapper
# ---------------------------------------------------------------------------
def conv_transpose_bn_silu(x, weight, gamma, beta, mean, var, *, k=2, s=2, eps=1e-5,
                           dot_dtype=jnp.bfloat16, out_dtype=None, tm=None, tn=None):
    """Fused ConvTranspose2d(k=s, p=0, bias=False) + BatchNorm2d(eval) + SiLU.

    x: (N, C1, H, W) NCHW.  weight: (C1, C2, k, k) (PyTorch ConvTranspose2d layout).
    dot_dtype: dtype of the matmul operands (None -> x.dtype). f32 accumulation kept.
    out_dtype: dtype the kernel stores / returns (None -> x.dtype); bf16 halves writeback.
    """
    assert k == s, "kernel assumes non-overlapping deconv (k == s, p == 0)"
    N, C1, H, W = x.shape
    C2 = weight.shape[1]
    KK = k * k
    M = N * H * W

    dot_dtype = x.dtype if dot_dtype is None else jnp.dtype(dot_dtype)
    out_dtype = x.dtype if out_dtype is None else jnp.dtype(out_dtype)

    # Pad C2 so the flattened output lane width KK*C2p is a multiple of 128
    # (lane-dense, unmasked vst stores; padded columns are sliced away below).
    lane_align = 128 // math.gcd(KK, 128)
    C2p = _round_up(C2, lane_align)
    cols = KK * C2p

    # NCHW -> flattened NHWC rows (layout plumbing; required by the NCHW interface).
    x_flat = jnp.transpose(x, (0, 2, 3, 1)).reshape(M, C1).astype(dot_dtype)

    # Fold BatchNorm (eval) into the weight (scale) and a per-column shift.
    inv_std = jax.lax.rsqrt(var + eps)
    scale = gamma * inv_std                                  # (C2,)
    shift = beta - mean * scale                              # (C2,)
    w = jnp.transpose(weight, (0, 2, 3, 1)) * scale          # (C1, k, k, C2), f32 fold
    w = w.reshape(C1, KK, C2)
    shift_kk = jnp.broadcast_to(shift, (KK, C2))
    if C2p != C2:
        w = jnp.pad(w, ((0, 0), (0, 0), (0, C2p - C2)))
        shift_kk = jnp.pad(shift_kk, ((0, 0), (0, C2p - C2)))
    w = w.reshape(C1, cols).astype(dot_dtype)                # columns ordered (di, dj, c2)
    shift_row = shift_kk.reshape(1, cols).astype(jnp.float32)

    budget, vmem_limit = _vmem_budgets()
    auto_tm, auto_tn = _select_tiles(M, C1, cols, dot_dtype, out_dtype, budget)
    tm = auto_tm if tm is None else tm
    tn = auto_tn if tn is None else tn
    assert tm % 8 == 0 and cols % tn == 0 and tn % 128 == 0

    M_pad = -(-M // tm) * tm
    if M_pad != M:
        x_flat = jnp.pad(x_flat, ((0, M_pad - M), (0, 0)))

    dot_isize = jnp.dtype(dot_dtype).itemsize
    out_isize = jnp.dtype(out_dtype).itemsize
    cost = pl.CostEstimate(
        flops=2 * M_pad * C1 * cols,
        transcendentals=2 * M_pad * cols,
        bytes_accessed=(M_pad * C1 * dot_isize + C1 * cols * dot_isize
                        + 4 * cols + M_pad * cols * out_isize),
    )

    out = pl.pallas_call(
        convtranspose_bn_silu_kernel,
        out_shape=jax.ShapeDtypeStruct((M_pad, cols), out_dtype),
        grid_spec=pltpu.PrefetchScalarGridSpec(
            num_scalar_prefetch=0,
            grid=(M_pad // tm, cols // tn),
            in_specs=[
                pl.BlockSpec((tm, C1), lambda m, n: (m, 0)),   # x rows (not refetched over n)
                pl.BlockSpec((C1, tn), lambda m, n: (0, n)),   # BN-scaled weight
                pl.BlockSpec((1, tn), lambda m, n: (0, n)),    # BN shift
            ],
            out_specs=pl.BlockSpec((tm, tn), lambda m, n: (m, n)),
        ),
        compiler_params=pltpu.CompilerParams(
            dimension_semantics=("parallel", "arbitrary"),
            vmem_limit_bytes=vmem_limit,
        ),
        cost_estimate=cost,
    )(x_flat, w, shift_row)

    if M_pad != M:
        out = out[:M]

    # (M, KK*C2p) -> (N, H, W, k, k, C2p) -> drop channel padding -> NCHW.
    # One output transpose is unavoidable for the NCHW interface; an NHWC-native
    # pipeline would make the kernel output reshape directly to (N, H*k, W*k, C2).
    y = out.reshape(N, H, W, k, k, C2p)
    if C2p != C2:
        y = y[..., :C2]
    y = jnp.transpose(y, (0, 5, 1, 3, 2, 4)).reshape(N, C2, H * k, W * k)
    return y


# ---------------------------------------------------------------------------
# Pure-JAX reference (ConvTranspose.forward: deconv -> eval BN -> SiLU)
# ---------------------------------------------------------------------------
def ref_forward(x, weight, gamma, beta, mean, var, *, k=2, s=2, eps=1e-5):
    N, C1, H, W = x.shape
    C2 = weight.shape[1]
    y = jnp.einsum('ncij,codk->noidjk', x, weight)            # (N, C2, H, k, W, k)
    y = y.reshape(N, C2, H * k, W * k)
    scale = gamma / jnp.sqrt(var + eps)
    shift = beta - mean * scale
    y = y * scale[None, :, None, None] + shift[None, :, None, None]
    return y * jax.nn.sigmoid(y)


if __name__ == "__main__":
    key = jax.random.PRNGKey(0)
    k_x, k_w, k_g, k_b, k_m, k_v = jax.random.split(key, 6)

    N, C1, C2, H, W = 2, 4, 8, 16, 16
    K = S = 2

    x = jax.random.normal(k_x, (N, C1, H, W), dtype=jnp.float32)
    # ConvTranspose2d weight: (in_channels, out_channels, kH, kW); no bias (bn=True)
    weight = jax.random.normal(k_w, (C1, C2, K, K), dtype=jnp.float32) * 0.1
    # BatchNorm2d parameters / running stats (eval-mode semantics)
    gamma = 1.0 + 0.1 * jax.random.normal(k_g, (C2,), dtype=jnp.float32)
    beta = 0.1 * jax.random.normal(k_b, (C2,), dtype=jnp.float32)
    mean = 0.1 * jax.random.normal(k_m, (C2,), dtype=jnp.float32)
    var = jnp.abs(jax.random.normal(k_v, (C2,), dtype=jnp.float32)) + 0.5

    out = conv_transpose_bn_silu(x, weight, gamma, beta, mean, var, k=K, s=S)
    out = jax.block_until_ready(out)

    ref = ref_forward(x, weight, gamma, beta, mean, var, k=K, s=S)
    # Tolerance covers the bf16 matmul operands (accumulation stays f32, sigmoid exact).
    np.testing.assert_allclose(np.asarray(out), np.asarray(ref), rtol=2e-2, atol=2e-2)
    assert out.shape == (N, C2, H * S, W * S)

    print("KERNEL_OK")
</pallas_src>

<mosaic_0001>
module attributes {stable_mosaic.version = 11 : i64} {
  func.func @convtranspose_bn_silu_kernel(%arg0: i32, %arg1: i32, %arg2: memref<512x4xbf16, #tpu.memory_space<vmem>>, %arg3: memref<4x128xbf16, #tpu.memory_space<vmem>>, %arg4: memref<1x128xf32, #tpu.memory_space<vmem>>, %arg5: memref<512x128xf32, #tpu.memory_space<vmem>>) attributes {dimension_semantics = [#tpu.dimension_semantics<parallel>, #tpu.dimension_semantics<arbitrary>], iteration_bounds = array<i64: 1, 1>, scalar_prefetch = 0 : i64, scratch_operands = 0 : i64, tpu.core_type = #tpu.core_type<tc>, window_params = [{transform_indices = @transform_0, window_bounds = array<i64: 512, 4>}, {transform_indices = @transform_1, window_bounds = array<i64: 4, 128>}, {transform_indices = @transform_2, window_bounds = array<i64: 1, 128>}, {transform_indices = @transform_3, window_bounds = array<i64: 512, 128>}]} {
    %c0 = arith.constant 0 : index
    %c0_0 = arith.constant 0 : index
    %0 = vector.load %arg2[%c0, %c0_0] : memref<512x4xbf16, #tpu.memory_space<vmem>>, vector<512x4xbf16>
    %c0_1 = arith.constant 0 : index
    %c0_2 = arith.constant 0 : index
    %1 = vector.load %arg3[%c0_1, %c0_2] : memref<4x128xbf16, #tpu.memory_space<vmem>>, vector<4x128xbf16>
    %cst = arith.constant dense<0.000000e+00> : vector<512x128xf32>
    %2 = tpu.matmul %0, %1, %cst {dimension_numbers = #tpu.dot_dimension_numbers<[1], [0], [0], [1], [0, 0, 1, 1], [], []>} : vector<512x4xbf16>, vector<4x128xbf16>, vector<512x128xf32> -> vector<512x128xf32>
    %c0_3 = arith.constant 0 : index
    %c0_4 = arith.constant 0 : index
    %3 = vector.load %arg4[%c0_3, %c0_4] : memref<1x128xf32, #tpu.memory_space<vmem>>, vector<1x128xf32>
    %4 = vector.broadcast %3 : vector<1x128xf32> to vector<512x128xf32>
    %5 = arith.addf %2, %4 : vector<512x128xf32>
    %cst_5 = arith.constant 0.000000e+00 : f32
    %6 = vector.broadcast %cst_5 : f32 to vector<512x128xf32>
    %7 = arith.subf %6, %5 : vector<512x128xf32>
    %8 = math.exp %7 : vector<512x128xf32>
    %cst_6 = arith.constant 1.000000e+00 : f32
    %9 = vector.broadcast %cst_6 : f32 to vector<512x128xf32>
    %10 = arith.addf %9, %8 : vector<512x128xf32>
    %11 = arith.divf %5, %10 : vector<512x128xf32>
    %c0_7 = arith.constant 0 : index
    %c0_8 = arith.constant 0 : index
    %12 = vector.load %arg5[%c0_7, %c0_8] : memref<512x128xf32, #tpu.memory_space<vmem>>, vector<512x128xf32>
    tpu.vector_store %arg5[%c0_7, %c0_8], %11 {strides = array<i32>} : memref<512x128xf32, #tpu.memory_space<vmem>>, vector<512x128xf32>,
    return
  }
  func.func @transform_0(%arg0: i32, %arg1: i32) -> (i32, i32) {
    %c0_i32 = arith.constant 0 : i32
    %c0_i32_0 = arith.constant 0 : i32
    return %arg0, %c0_i32 : i32, i32
  }
  func.func @transform_1(%arg0: i32, %arg1: i32) -> (i32, i32) {
    %c0_i32 = arith.constant 0 : i32
    %c0_i32_0 = arith.constant 0 : i32
    return %c0_i32, %arg1 : i32, i32
  }
  func.func @transform_2(%arg0: i32, %arg1: i32) -> (i32, i32) {
    %c0_i32 = arith.constant 0 : i32
    %c0_i32_0 = arith.constant 0 : i32
    return %c0_i32, %arg1 : i32, i32
  }
  func.func @transform_3(%arg0: i32, %arg1: i32) -> (i32, i32) {
    %c0_i32 = arith.constant 0 : i32
    return %arg0, %arg1 : i32, i32
  }
}

</mosaic_0001>

<llo_original>
// kernel: tpu_custom_call.1
$region0: #{tpu_custom_call.1}
  #allocation0 [shape = 'u32[]', space=smem, size = 0x4, offset = 0x4, fixed_abs, tag = 'smem constant byte address 0x4 - core index']
  #allocation1 [shape = 'u32[144,128]{1,0:T(1,128)}', space=vmem, size = 0x12000, scoped, tag = 'internal scratch']
  %s0 = inlined_call_operand.vmem [shape: bf16[512,4], index: 0, kind: input, shape index: {}]
  %s1 = inlined_call_operand.vmem [shape: bf16[4,128], index: 1, kind: input, shape index: {}]
  %s2 = inlined_call_operand.vmem [shape: f32[1,128], index: 2, kind: input, shape index: {}]
  %s3 = inlined_call_operand.hbm [shape: f32[512,128], index: 3, kind: output, shape index: {}]
  %s4 = sld [smem:[#allocation0]]
  $region22: #{tpu_custom_call.1} parent=0
    _
  %s6 = ssub.s32 1, %s4
  %s7 = scalar_select 0, %s6, %s4
  $region1: #{tpu_custom_call.1} parent=0
    #allocation2 [shape = 'u8[262144]{0}', space=vmem, size = 0x40000, scoped, tag = 'output window, operand 0, single buffered']
    #allocation3 [shape = 's32[1]{0}', space=sflag, size = 0x4, scoped, tag = 'scoped memory for tpu_custom_call.1']
    %8 = vsyncpa [#allocation3], 0
    // Predicated region
    $region2: #{tpu_custom_call.1} parent=1 // pred_check
      _
    $region3: #{tpu_custom_call.1} parent=1 // pred_check_branch
      %10 = sbr.rel (0) target = $region5
    $region4: #{tpu_custom_call.1} parent=1 // pred_region
      _
    $region5: #{tpu_custom_call.1} parent=1 // pred_fallthru
      _
    // Predicated region
    $region6: #{tpu_custom_call.1} parent=1 // pred_check
      _
    $region7: #{tpu_custom_call.1} parent=1 // pred_check_branch
      %12 = sbr.rel (0) target = $region9
    $region8: #{tpu_custom_call.1} parent=1 // pred_region
      _
    $region9: #{tpu_custom_call.1} parent=1 // pred_fallthru
      _
    // Predicated region
    $region10: #{tpu_custom_call.1} parent=1 // pred_check
      _
    $region11: #{tpu_custom_call.1} parent=1 // pred_check_branch
      %14 = sbr.rel (0) target = $region13
    $region12: #{tpu_custom_call.1} parent=1 // pred_region
      _
    $region13: #{tpu_custom_call.1} parent=1 // pred_fallthru
      _
    %v16 = vld [vmem:[%s0] sm:$0xf]
    %v17 = vld [vmem:[%s0 + $0x4] sm:$0xf]
    %v18 = vld [vmem:[%s0 + $0x8] sm:$0xf]
    %v19 = vld [vmem:[%s0 + $0xc] sm:$0xf]
    %v20 = vld [vmem:[%s0 + $0x10] sm:$0xf]
    %v21 = vld [vmem:[%s0 + $0x14] sm:$0xf]
    %v22 = vld [vmem:[%s0 + $0x18] sm:$0xf]
    %v23 = vld [vmem:[%s0 + $0x1c] sm:$0xf]
    %v24 = vld [vmem:[%s0 + $0x20] sm:$0xf]
    %v25 = vld [vmem:[%s0 + $0x24] sm:$0xf]
    %v26 = vld [vmem:[%s0 + $0x28] sm:$0xf]
    %v27 = vld [vmem:[%s0 + $0x2c] sm:$0xf]
    %v28 = vld [vmem:[%s0 + $0x30] sm:$0xf]
    %v29 = vld [vmem:[%s0 + $0x34] sm:$0xf]
    %v30 = vld [vmem:[%s0 + $0x38] sm:$0xf]
    %v31 = vld [vmem:[%s0 + $0x3c] sm:$0xf]
    %v32 = vld [vmem:[%s0 + $0x40] sm:$0xf]
    %v33 = vld [vmem:[%s0 + $0x44] sm:$0xf]
    %v34 = vld [vmem:[%s0 + $0x48] sm:$0xf]
    %v35 = vld [vmem:[%s0 + $0x4c] sm:$0xf]
    %v36 = vld [vmem:[%s0 + $0x50] sm:$0xf]
    %v37 = vld [vmem:[%s0 + $0x54] sm:$0xf]
    %v38 = vld [vmem:[%s0 + $0x58] sm:$0xf]
    %v39 = vld [vmem:[%s0 + $0x5c] sm:$0xf]
    %v40 = vld [vmem:[%s0 + $0x60] sm:$0xf]
    %v41 = vld [vmem:[%s0 + $0x64] sm:$0xf]
    %v42 = vld [vmem:[%s0 + $0x68] sm:$0xf]
    %v43 = vld [vmem:[%s0 + $0x6c] sm:$0xf]
    %v44 = vld [vmem:[%s0 + $0x70] sm:$0xf]
    %v45 = vld [vmem:[%s0 + $0x74] sm:$0xf]
    %v46 = vld [vmem:[%s0 + $0x78] sm:$0xf]
    %v47 = vld [vmem:[%s0 + $0x7c] sm:$0xf]
    %v48 = vld [vmem:[%s0 + $0x80] sm:$0xf]
    %v49 = vld [vmem:[%s0 + $0x84] sm:$0xf]
    %v50 = vld [vmem:[%s0 + $0x88] sm:$0xf]
    %v51 = vld [vmem:[%s0 + $0x8c] sm:$0xf]
    %v52 = vld [vmem:[%s0 + $0x90] sm:$0xf]
    %v53 = vld [vmem:[%s0 + $0x94] sm:$0xf]
    %v54 = vld [vmem:[%s0 + $0x98] sm:$0xf]
    %v55 = vld [vmem:[%s0 + $0x9c] sm:$0xf]
    %v56 = vld [vmem:[%s0 + $0xa0] sm:$0xf]
    %v57 = vld [vmem:[%s0 + $0xa4] sm:$0xf]
    %v58 = vld [vmem:[%s0 + $0xa8] sm:$0xf]
    %v59 = vld [vmem:[%s0 + $0xac] sm:$0xf]
    %v60 = vld [vmem:[%s0 + $0xb0] sm:$0xf]
    %v61 = vld [vmem:[%s0 + $0xb4] sm:$0xf]
    %v62 = vld [vmem:[%s0 + $0xb8] sm:$0xf]
    %v63 = vld [vmem:[%s0 + $0xbc] sm:$0xf]
    %v64 = vld [vmem:[%s0 + $0xc0] sm:$0xf]
    %v65 = vld [vmem:[%s0 + $0xc4] sm:$0xf]
    %v66 = vld [vmem:[%s0 + $0xc8] sm:$0xf]
    %v67 = vld [vmem:[%s0 + $0xcc] sm:$0xf]
    %v68 = vld [vmem:[%s0 + $0xd0] sm:$0xf]
    %v69 = vld [vmem:[%s0 + $0xd4] sm:$0xf]
    %v70 = vld [vmem:[%s0 + $0xd8] sm:$0xf]
    %v71 = vld [vmem:[%s0 + $0xdc] sm:$0xf]
    %v72 = vld [vmem:[%s0 + $0xe0] sm:$0xf]
    %v73 = vld [vmem:[%s0 + $0xe4] sm:$0xf]
    %v74 = vld [vmem:[%s0 + $0xe8] sm:$0xf]
    %v75 = vld [vmem:[%s0 + $0xec] sm:$0xf]
    %v76 = vld [vmem:[%s0 + $0xf0] sm:$0xf]
    %v77 = vld [vmem:[%s0 + $0xf4] sm:$0xf]
    %v78 = vld [vmem:[%s0 + $0xf8] sm:$0xf]
    %v79 = vld [vmem:[%s0 + $0xfc] sm:$0xf]
    %v80 = vld [vmem:[%s1] sm:$0x3]
    %v81 = vld [vmem:[%s2] sm:$0x1]
    %v83 = vlaneseq
    %v84 = vshrl.u32 %v83, 7
    %v85 = vsub.s32 0, %v84
    %v86 = vrot.slane %v81, %v85
    %v152 = vunpack.c.l.b16 %v16
    %v153 = vunpack.c.l.b16 %v17
    %v154 = vunpack.c.l.b16 %v18
    %v155 = vunpack.c.l.b16 %v19
    %v156 = vunpack.c.l.b16 %v20
    %v157 = vunpack.c.l.b16 %v21
    %v158 = vunpack.c.l.b16 %v22
    %v159 = vunpack.c.l.b16 %v23
    %v160 = vunpack.c.l.b16 %v24
    %v161 = vunpack.c.l.b16 %v25
    %v162 = vunpack.c.l.b16 %v26
    %v163 = vunpack.c.l.b16 %v27
    %v164 = vunpack.c.l.b16 %v28
    %v165 = vunpack.c.l.b16 %v29
    %v166 = vunpack.c.l.b16 %v30
    %v167 = vunpack.c.l.b16 %v31
    %v168 = vunpack.c.l.b16 %v32
    %v169 = vunpack.c.l.b16 %v33
    %v170 = vunpack.c.l.b16 %v34
    %v171 = vunpack.c.l.b16 %v35
    %v172 = vunpack.c.l.b16 %v36
    %v173 = vunpack.c.l.b16 %v37
    %v174 = vunpack.c.l.b16 %v38
    %v175 = vunpack.c.l.b16 %v39
    %v176 = vunpack.c.l.b16 %v40
    %v177 = vunpack.c.l.b16 %v41
    %v178 = vunpack.c.l.b16 %v42
    %v179 = vunpack.c.l.b16 %v43
    %v180 = vunpack.c.l.b16 %v44
    %v181 = vunpack.c.l.b16 %v45
    %v182 = vunpack.c.l.b16 %v46
    %v183 = vunpack.c.l.b16 %v47
    %v184 = vunpack.c.l.b16 %v48
    %v185 = vunpack.c.l.b16 %v49
    %v186 = vunpack.c.l.b16 %v50
    %v187 = vunpack.c.l.b16 %v51
    %v188 = vunpack.c.l.b16 %v52
    %v189 = vunpack.c.l.b16 %v53
    %v190 = vunpack.c.l.b16 %v54
    %v191 = vunpack.c.l.b16 %v55
    %v192 = vunpack.c.l.b16 %v56
    %v193 = vunpack.c.l.b16 %v57
    %v194 = vunpack.c.l.b16 %v58
    %v195 = vunpack.c.l.b16 %v59
    %v196 = vunpack.c.l.b16 %v60
    %v197 = vunpack.c.l.b16 %v61
    %v198 = vunpack.c.l.b16 %v62
    %v199 = vunpack.c.l.b16 %v63
    %v200 = vunpack.c.l.b16 %v64
    %v201 = vunpack.c.l.b16 %v65
    %v202 = vunpack.c.l.b16 %v66
    %v203 = vunpack.c.l.b16 %v67
    %v204 = vunpack.c.l.b16 %v68
    %v205 = vunpack.c.l.b16 %v69
    %v206 = vunpack.c.l.b16 %v70
    %v207 = vunpack.c.l.b16 %v71
    %v208 = vunpack.c.l.b16 %v72
    %v209 = vunpack.c.l.b16 %v73
    %v210 = vunpack.c.l.b16 %v74
    %v211 = vunpack.c.l.b16 %v75
    %v212 = vunpack.c.l.b16 %v76
    %v213 = vunpack.c.l.b16 %v77
    %v214 = vunpack.c.l.b16 %v78
    %v215 = vunpack.c.l.b16 %v79
    %v216 = vpack.c.b16 %v153, %v152
    %v217 = vpack.c.b16 %v155, %v154
    %v218 = vpack.c.b16 %v157, %v156
    %v219 = vpack.c.b16 %v159, %v158
    %v220 = vpack.c.b16 %v161, %v160
    %v221 = vpack.c.b16 %v163, %v162
    %v222 = vpack.c.b16 %v165, %v164
    %v223 = vpack.c.b16 %v167, %v166
    %v224 = vpack.c.b16 %v169, %v168
    %v225 = vpack.c.b16 %v171, %v170
    %v226 = vpack.c.b16 %v173, %v172
    %v227 = vpack.c.b16 %v175, %v174
    %v228 = vpack.c.b16 %v177, %v176
    %v229 = vpack.c.b16 %v179, %v178
    %v230 = vpack.c.b16 %v181, %v180
    %v231 = vpack.c.b16 %v183, %v182
    %v232 = vpack.c.b16 %v185, %v184
    %v233 = vpack.c.b16 %v187, %v186
    %v234 = vpack.c.b16 %v189, %v188
    %v235 = vpack.c.b16 %v191, %v190
    %v236 = vpack.c.b16 %v193, %v192
    %v237 = vpack.c.b16 %v195, %v194
    %v238 = vpack.c.b16 %v197, %v196
    %v239 = vpack.c.b16 %v199, %v198
    %v240 = vpack.c.b16 %v201, %v200
    %v241 = vpack.c.b16 %v203, %v202
    %v242 = vpack.c.b16 %v205, %v204
    %v243 = vpack.c.b16 %v207, %v206
    %v244 = vpack.c.b16 %v209, %v208
    %v245 = vpack.c.b16 %v211, %v210
    %v246 = vpack.c.b16 %v213, %v212
    %v247 = vpack.c.b16 %v215, %v214
    %vm248 = vcmask 31744
    %v250 = vsel %vm248, %v216, 0
    %v253 = vsel %vm248, %v217, 0
    %v256 = vsel %vm248, %v218, 0
    %v259 = vsel %vm248, %v219, 0
    %v262 = vsel %vm248, %v220, 0
    %v265 = vsel %vm248, %v221, 0
    %v268 = vsel %vm248, %v222, 0
    %v271 = vsel %vm248, %v223, 0
    %v274 = vsel %vm248, %v224, 0
    %v277 = vsel %vm248, %v225, 0
    %v280 = vsel %vm248, %v226, 0
    %v283 = vsel %vm248, %v227, 0
    %v286 = vsel %vm248, %v228, 0
    %v289 = vsel %vm248, %v229, 0
    %v292 = vsel %vm248, %v230, 0
    %v295 = vsel %vm248, %v231, 0
    %v298 = vsel %vm248, %v232, 0
    %v301 = vsel %vm248, %v233, 0
    %v304 = vsel %vm248, %v234, 0
    %v307 = vsel %vm248, %v235, 0
    %v310 = vsel %vm248, %v236, 0
    %v313 = vsel %vm248, %v237, 0
    %v316 = vsel %vm248, %v238, 0
    %v319 = vsel %vm248, %v239, 0
    %v322 = vsel %vm248, %v240, 0
    %v325 = vsel %vm248, %v241, 0
    %v328 = vsel %vm248, %v242, 0
    %v331 = vsel %vm248, %v243, 0
    %v334 = vsel %vm248, %v244, 0
    %v337 = vsel %vm248, %v245, 0
    %v340 = vsel %vm248, %v246, 0
    %v343 = vsel %vm248, %v247, 0
    %vm345 = vcmask 1041408
    %v347 = vsel %vm345, %v80, 0
    %349 = vmatprep.subr.bf16.mxu0 0
    %350 = vmatpush1.bf16.msra.mxu0 %v347
    %351 = vmatprep.subr.bf16.mxu0 0
    %352 = vmatpush1.bf16.msra.mxu0 0
    %353 = vmatprep.subr.bf16.mxu0 0
    %354 = vmatpush1.bf16.msra.mxu0 0
    %355 = vmatprep.subr.bf16.mxu0 0
    %356 = vmatpush1.bf16.msra.mxu0 0
    %357 = vmatprep.subr.bf16.mxu0 0
    %358 = vmatpush1.bf16.msra.mxu0 0
    %359 = vmatprep.subr.bf16.mxu0 0
    %360 = vmatpush1.bf16.msra.mxu0 0
    %361 = vmatprep.subr.bf16.mxu0 0
    %362 = vmatpush1.bf16.msra.mxu0 0
    %363 = vmatprep.subr.bf16.mxu0 0
    %364 = vmatpush1.bf16.msra.mxu0 0
    %365 = vmatprep.subr.bf16.mxu0 0
    %366 = vmatpush1.bf16.msra.mxu0 0
    %367 = vmatprep.subr.bf16.mxu0 0
    %368 = vmatpush1.bf16.msra.mxu0 0
    %369 = vmatprep.subr.bf16.mxu0 0
    %370 = vmatpush1.bf16.msra.mxu0 0
    %371 = vmatprep.subr.bf16.mxu0 0
    %372 = vmatpush1.bf16.msra.mxu0 0
    %373 = vmatprep.subr.bf16.mxu0 0
    %374 = vmatpush1.bf16.msra.mxu0 0
    %375 = vmatprep.subr.bf16.mxu0 0
    %376 = vmatpush1.bf16.msra.mxu0 0
    %377 = vmatprep.subr.bf16.mxu0 0
    %378 = vmatpush1.bf16.msra.mxu0 0
    %379 = vmatprep.subr.bf16.mxu0 0
    %380 = vmatpush1.bf16.msra.mxu0 0
    %381 = vmatprep.mubr.bf16.mxu0 0
    %382 = vmatmul.mubr.bf16.gmra.mrb[0].mxu0 %v250
    %v383 = vpop.f32.mrb[0].mxu0
    %v384 = vadd.f32 %v86, %v383
    %v385 = vpop.f32.mrb[0].mxu0
    %v386 = vpop.f32.mrb[0].mxu0
    %v387 = vadd.f32 %v86, %v386
    %v388 = vpop.f32.mrb[0].mxu0
    %389 = vmatprep.mubr.bf16.mxu0 0
    %390 = vmatmul.mubr.bf16.gmra.mrb[0].mxu0 %v253
    %v391 = vpop.f32.mrb[0].mxu0
    %v392 = vadd.f32 %v86, %v391
    %v393 = vpop.f32.mrb[0].mxu0
    %v394 = vpop.f32.mrb[0].mxu0
    %v395 = vadd.f32 %v86, %v394
    %v396 = vpop.f32.mrb[0].mxu0
    %397 = vmatprep.mubr.bf16.mxu0 0
    %398 = vmatmul.mubr.bf16.gmra.mrb[0].mxu0 %v256
    %v399 = vpop.f32.mrb[0].mxu0
    %v400 = vadd.f32 %v86, %v399
    %v401 = vpop.f32.mrb[0].mxu0
    %v402 = vpop.f32.mrb[0].mxu0
    %v403 = vadd.f32 %v86, %v402
    %v404 = vpop.f32.mrb[0].mxu0
    %405 = vmatprep.mubr.bf16.mxu0 0
    %406 = vmatmul.mubr.bf16.gmra.mrb[0].mxu0 %v259
    %v407 = vpop.f32.mrb[0].mxu0
    %v408 = vadd.f32 %v86, %v407
    %v409 = vpop.f32.mrb[0].mxu0
    %v410 = vpop.f32.mrb[0].mxu0
    %v411 = vadd.f32 %v86, %v410
    %v412 = vpop.f32.mrb[0].mxu0
    %413 = vmatprep.mubr.bf16.mxu0 0
    %414 = vmatmul.mubr.bf16.gmra.mrb[0].mxu0 %v262
    %v415 = vpop.f32.mrb[0].mxu0
    %v416 = vadd.f32 %v86, %v415
    %v417 = vpop.f32.mrb[0].mxu0
    %v418 = vpop.f32.mrb[0].mxu0
    %v419 = vadd.f32 %v86, %v418
    %v420 = vpop.f32.mrb[0].mxu0
    %421 = vmatprep.mubr.bf16.mxu0 0
    %422 = vmatmul.mubr.bf16.gmra.mrb[0].mxu0 %v265
    %v423 = vpop.f32.mrb[0].mxu0
    %v424 = vadd.f32 %v86, %v423
    %v425 = vpop.f32.mrb[0].mxu0
    %v426 = vpop.f32.mrb[0].mxu0
    %v427 = vadd.f32 %v86, %v426
    %v428 = vpop.f32.mrb[0].mxu0
    %429 = vmatprep.mubr.bf16.mxu0 0
    %430 = vmatmul.mubr.bf16.gmra.mrb[0].mxu0 %v268
    %v431 = vpop.f32.mrb[0].mxu0
    %v432 = vadd.f32 %v86, %v431
    %v433 = vpop.f32.mrb[0].mxu0
    %v434 = vpop.f32.mrb[0].mxu0
    %v435 = vadd.f32 %v86, %v434
    %v436 = vpop.f32.mrb[0].mxu0
    %437 = vmatprep.mubr.bf16.mxu0 0
    %438 = vmatmul.mubr.bf16.gmra.mrb[0].mxu0 %v271
    %v439 = vpop.f32.mrb[0].mxu0
    %v440 = vadd.f32 %v86, %v439
    %v441 = vpop.f32.mrb[0].mxu0
    %v442 = vpop.f32.mrb[0].mxu0
    %v443 = vadd.f32 %v86, %v442
    %v444 = vpop.f32.mrb[0].mxu0
    %445 = vmatprep.mubr.bf16.mxu0 0
    %446 = vmatmul.mubr.bf16.gmra.mrb[0].mxu0 %v274
    %v447 = vpop.f32.mrb[0].mxu0
    %v448 = vadd.f32 %v86, %v447
    %v449 = vpop.f32.mrb[0].mxu0
    %v450 = vpop.f32.mrb[0].mxu0
    %v451 = vadd.f32 %v86, %v450
    %v452 = vpop.f32.mrb[0].mxu0
    %453 = vmatprep.mubr.bf16.mxu0 0
    %454 = vmatmul.mubr.bf16.gmra.mrb[0].mxu0 %v277
    %v455 = vpop.f32.mrb[0].mxu0
    %v456 = vadd.f32 %v86, %v455
    %v457 = vpop.f32.mrb[0].mxu0
    %v458 = vpop.f32.mrb[0].mxu0
    %v459 = vadd.f32 %v86, %v458
    %v460 = vpop.f32.mrb[0].mxu0
    %461 = vmatprep.mubr.bf16.mxu0 0
    %462 = vmatmul.mubr.bf16.gmra.mrb[0].mxu0 %v280
    %v463 = vpop.f32.mrb[0].mxu0
    %v464 = vadd.f32 %v86, %v463
    %v465 = vpop.f32.mrb[0].mxu0
    %v466 = vpop.f32.mrb[0].mxu0
    %v467 = vadd.f32 %v86, %v466
    %v468 = vpop.f32.mrb[0].mxu0
    %469 = vmatprep.mubr.bf16.mxu0 0
    %470 = vmatmul.mubr.bf16.gmra.mrb[0].mxu0 %v283
    %v471 = vpop.f32.mrb[0].mxu0
    %v472 = vadd.f32 %v86, %v471
    %v473 = vpop.f32.mrb[0].mxu0
    %v474 = vpop.f32.mrb[0].mxu0
    %v475 = vadd.f32 %v86, %v474
    %v476 = vpop.f32.mrb[0].mxu0
    %477 = vmatprep.mubr.bf16.mxu0 0
    %478 = vmatmul.mubr.bf16.gmra.mrb[0].mxu0 %v286
    %v479 = vpop.f32.mrb[0].mxu0
    %v480 = vadd.f32 %v86, %v479
    %v481 = vpop.f32.mrb[0].mxu0
    %v482 = vpop.f32.mrb[0].mxu0
    %v483 = vadd.f32 %v86, %v482
    %v484 = vpop.f32.mrb[0].mxu0
    %485 = vmatprep.mubr.bf16.mxu0 0
    %486 = vmatmul.mubr.bf16.gmra.mrb[0].mxu0 %v289
    %v487 = vpop.f32.mrb[0].mxu0
    %v488 = vadd.f32 %v86, %v487
    %v489 = vpop.f32.mrb[0].mxu0
    %v490 = vpop.f32.mrb[0].mxu0
    %v491 = vadd.f32 %v86, %v490
    %v492 = vpop.f32.mrb[0].mxu0
    %493 = vmatprep.mubr.bf16.mxu0 0
    %494 = vmatmul.mubr.bf16.gmra.mrb[0].mxu0 %v292
    %v495 = vpop.f32.mrb[0].mxu0
    %v496 = vadd.f32 %v86, %v495
    %v497 = vpop.f32.mrb[0].mxu0
    %v498 = vpop.f32.mrb[0].mxu0
    %v499 = vadd.f32 %v86, %v498
    %v500 = vpop.f32.mrb[0].mxu0
    %501 = vmatprep.mubr.bf16.mxu0 0
    %502 = vmatmul.mubr.bf16.gmra.mrb[0].mxu0 %v295
    %v503 = vpop.f32.mrb[0].mxu0
    %v504 = vadd.f32 %v86, %v503
    %v505 = vpop.f32.mrb[0].mxu0
    %v506 = vpop.f32.mrb[0].mxu0
    %v507 = vadd.f32 %v86, %v506
    %v508 = vpop.f32.mrb[0].mxu0
    %509 = vmatprep.mubr.bf16.mxu0 0
    %510 = vmatmul.mubr.bf16.gmra.mrb[0].mxu0 %v298
    %v511 = vpop.f32.mrb[0].mxu0
    %v512 = vadd.f32 %v86, %v511
    %v513 = vpop.f32.mrb[0].mxu0
    %v514 = vpop.f32.mrb[0].mxu0
    %v515 = vadd.f32 %v86, %v514
    %v516 = vpop.f32.mrb[0].mxu0
    %517 = vmatprep.mubr.bf16.mxu0 0
    %518 = vmatmul.mubr.bf16.gmra.mrb[0].mxu0 %v301
    %v519 = vpop.f32.mrb[0].mxu0
    %v520 = vadd.f32 %v86, %v519
    %v521 = vpop.f32.mrb[0].mxu0
    %v522 = vpop.f32.mrb[0].mxu0
    %v523 = vadd.f32 %v86, %v522
    %v524 = vpop.f32.mrb[0].mxu0
    %525 = vmatprep.mubr.bf16.mxu0 0
    %526 = vmatmul.mubr.bf16.gmra.mrb[0].mxu0 %v304
    %v527 = vpop.f32.mrb[0].mxu0
    %v528 = vadd.f32 %v86, %v527
    %v529 = vpop.f32.mrb[0].mxu0
    %v530 = vpop.f32.mrb[0].mxu0
    %v531 = vadd.f32 %v86, %v530
    %v532 = vpop.f32.mrb[0].mxu0
    %533 = vmatprep.mubr.bf16.mxu0 0
    %534 = vmatmul.mubr.bf16.gmra.mrb[0].mxu0 %v307
    %v535 = vpop.f32.mrb[0].mxu0
    %v536 = vadd.f32 %v86, %v535
    %v537 = vpop.f32.mrb[0].mxu0
    %v538 = vpop.f32.mrb[0].mxu0
    %v539 = vadd.f32 %v86, %v538
    %v540 = vpop.f32.mrb[0].mxu0
    %541 = vmatprep.mubr.bf16.mxu0 0
    %542 = vmatmul.mubr.bf16.gmra.mrb[0].mxu0 %v310
    %v543 = vpop.f32.mrb[0].mxu0
    %v544 = vadd.f32 %v86, %v543
    %v545 = vpop.f32.mrb[0].mxu0
    %v546 = vpop.f32.mrb[0].mxu0
    %v547 = vadd.f32 %v86, %v546
    %v548 = vpop.f32.mrb[0].mxu0
    %549 = vmatprep.mubr.bf16.mxu0 0
    %550 = vmatmul.mubr.bf16.gmra.mrb[0].mxu0 %v313
    %v551 = vpop.f32.mrb[0].mxu0
    %v552 = vadd.f32 %v86, %v551
    %v553 = vpop.f32.mrb[0].mxu0
    %v554 = vpop.f32.mrb[0].mxu0
    %v555 = vadd.f32 %v86, %v554
    %v556 = vpop.f32.mrb[0].mxu0
    %557 = vmatprep.mubr.bf16.mxu0 0
    %558 = vmatmul.mubr.bf16.gmra.mrb[0].mxu0 %v316
    %v559 = vpop.f32.mrb[0].mxu0
    %v560 = vadd.f32 %v86, %v559
    %v561 = vpop.f32.mrb[0].mxu0
    %v562 = vpop.f32.mrb[0].mxu0
    %v563 = vadd.f32 %v86, %v562
    %v564 = vpop.f32.mrb[0].mxu0
    %565 = vmatprep.mubr.bf16.mxu0 0
    %566 = vmatmul.mubr.bf16.gmra.mrb[0].mxu0 %v319
    %v567 = vpop.f32.mrb[0].mxu0
    %v568 = vadd.f32 %v86, %v567
    %v569 = vpop.f32.mrb[0].mxu0
    %v570 = vpop.f32.mrb[0].mxu0
    %v571 = vadd.f32 %v86, %v570
    %v572 = vpop.f32.mrb[0].mxu0
    %573 = vmatprep.mubr.bf16.mxu0 0
    %574 = vmatmul.mubr.bf16.gmra.mrb[0].mxu0 %v322
    %v575 = vpop.f32.mrb[0].mxu0
    %v576 = vadd.f32 %v86, %v575
    %v577 = vpop.f32.mrb[0].mxu0
    %v578 = vpop.f32.mrb[0].mxu0
    %v579 = vadd.f32 %v86, %v578
    %v580 = vpop.f32.mrb[0].mxu0
    %581 = vmatprep.mubr.bf16.mxu0 0
    %582 = vmatmul.mubr.bf16.gmra.mrb[0].mxu0 %v325
    %v583 = vpop.f32.mrb[0].mxu0
    %v584 = vadd.f32 %v86, %v583
    %v585 = vpop.f32.mrb[0].mxu0
    %v586 = vpop.f32.mrb[0].mxu0
    %v587 = vadd.f32 %v86, %v586
    %v588 = vpop.f32.mrb[0].mxu0
    %589 = vmatprep.mubr.bf16.mxu0 0
    %590 = vmatmul.mubr.bf16.gmra.mrb[0].mxu0 %v328
    %v591 = vpop.f32.mrb[0].mxu0
    %v592 = vadd.f32 %v86, %v591
    %v593 = vpop.f32.mrb[0].mxu0
    %v594 = vpop.f32.mrb[0].mxu0
    %v595 = vadd.f32 %v86, %v594
    %v596 = vpop.f32.mrb[0].mxu0
    %597 = vmatprep.mubr.bf16.mxu0 0
    %598 = vmatmul.mubr.bf16.gmra.mrb[0].mxu0 %v331
    %v599 = vpop.f32.mrb[0].mxu0
    %v600 = vadd.f32 %v86, %v599
    %v601 = vpop.f32.mrb[0].mxu0
    %v602 = vpop.f32.mrb[0].mxu0
    %v603 = vadd.f32 %v86, %v602
    %v604 = vpop.f32.mrb[0].mxu0
    %605 = vmatprep.mubr.bf16.mxu0 0
    %606 = vmatmul.mubr.bf16.gmra.mrb[0].mxu0 %v334
    %v607 = vpop.f32.mrb[0].mxu0
    %v608 = vadd.f32 %v86, %v607
    %v609 = vpop.f32.mrb[0].mxu0
    %v610 = vpop.f32.mrb[0].mxu0
    %v611 = vadd.f32 %v86, %v610
    %v612 = vpop.f32.mrb[0].mxu0
    %613 = vmatprep.mubr.bf16.mxu0 0
    %614 = vmatmul.mubr.bf16.gmra.mrb[0].mxu0 %v337
    %v615 = vpop.f32.mrb[0].mxu0
    %v616 = vadd.f32 %v86, %v615
    %v617 = vpop.f32.mrb[0].mxu0
    %v618 = vpop.f32.mrb[0].mxu0
    %v619 = vadd.f32 %v86, %v618
    %v620 = vpop.f32.mrb[0].mxu0
    %621 = vmatprep.mubr.bf16.mxu0 0
    %622 = vmatmul.mubr.bf16.gmra.mrb[0].mxu0 %v340
    %v623 = vpop.f32.mrb[0].mxu0
    %v624 = vadd.f32 %v86, %v623
    %v625 = vpop.f32.mrb[0].mxu0
    %v626 = vpop.f32.mrb[0].mxu0
    %v627 = vadd.f32 %v86, %v626
    %v628 = vpop.f32.mrb[0].mxu0
    %629 = vmatprep.mubr.bf16.mxu0 0
    %630 = vmatmul.mubr.bf16.gmra.mrb[0].mxu0 %v343
    %v631 = vpop.f32.mrb[0].mxu0
    %v632 = vadd.f32 %v86, %v631
    %v633 = vpop.f32.mrb[0].mxu0
    %v634 = vpop.f32.mrb[0].mxu0
    %v635 = vadd.f32 %v86, %v634
    %v636 = vpop.f32.mrb[0].mxu0
    %637 = vdwg.mxu0
    %v638 = vsub.f32 0.0, %v384
    %v639 = vsub.f32 0.0, %v387
    %v640 = vsub.f32 0.0, %v392
    %v641 = vsub.f32 0.0, %v395
    %v642 = vsub.f32 0.0, %v400
    %v643 = vsub.f32 0.0, %v403
    %v644 = vsub.f32 0.0, %v408
    %v645 = vsub.f32 0.0, %v411
    %v646 = vsub.f32 0.0, %v416
    %v647 = vsub.f32 0.0, %v419
    %v648 = vsub.f32 0.0, %v424
    %v649 = vsub.f32 0.0, %v427
    %v650 = vsub.f32 0.0, %v432
    %v651 = vsub.f32 0.0, %v435
    %v652 = vsub.f32 0.0, %v440
    %v653 = vsub.f32 0.0, %v443
    %v654 = vsub.f32 0.0, %v448
    %v655 = vsub.f32 0.0, %v451
    %v656 = vsub.f32 0.0, %v456
    %v657 = vsub.f32 0.0, %v459
    %v658 = vsub.f32 0.0, %v464
    %v659 = vsub.f32 0.0, %v467
    %v660 = vsub.f32 0.0, %v472
    %v661 = vsub.f32 0.0, %v475
    %v662 = vsub.f32 0.0, %v480
    %v663 = vsub.f32 0.0, %v483
    %v664 = vsub.f32 0.0, %v488
    %v665 = vsub.f32 0.0, %v491
    %v666 = vsub.f32 0.0, %v496
    %v667 = vsub.f32 0.0, %v499
    %v668 = vsub.f32 0.0, %v504
    %v669 = vsub.f32 0.0, %v507
    %v670 = vsub.f32 0.0, %v512
    %v671 = vsub.f32 0.0, %v515
    %v672 = vsub.f32 0.0, %v520
    %v673 = vsub.f32 0.0, %v523
    %v674 = vsub.f32 0.0, %v528
    %v675 = vsub.f32 0.0, %v531
    %v676 = vsub.f32 0.0, %v536
    %v677 = vsub.f32 0.0, %v539
    %v678 = vsub.f32 0.0, %v544
    %v679 = vsub.f32 0.0, %v547
    %v680 = vsub.f32 0.0, %v552
    %v681 = vsub.f32 0.0, %v555
    %v682 = vsub.f32 0.0, %v560
    %v683 = vsub.f32 0.0, %v563
    %v684 = vsub.f32 0.0, %v568
    %v685 = vsub.f32 0.0, %v571
    %v686 = vsub.f32 0.0, %v576
    %v687 = vsub.f32 0.0, %v579
    %v688 = vsub.f32 0.0, %v584
    %v689 = vsub.f32 0.0, %v587
    %v690 = vsub.f32 0.0, %v592
    %v691 = vsub.f32 0.0, %v595
    %v692 = vsub.f32 0.0, %v600
    %v693 = vsub.f32 0.0, %v603
    %v694 = vsub.f32 0.0, %v608
    %v695 = vsub.f32 0.0, %v611
    %v696 = vsub.f32 0.0, %v616
    %v697 = vsub.f32 0.0, %v619
    %v698 = vsub.f32 0.0, %v624
    %v699 = vsub.f32 0.0, %v627
    %v700 = vsub.f32 0.0, %v632
    %v701 = vsub.f32 0.0, %v635
    %v702 = vmul.f32 %v638, 1.442695
    %v703 = vpow.pop %v702
    %v704 = vmul.f32 %v639, 1.442695
    %v705 = vpow.pop %v704
    %v706 = vmul.f32 %v640, 1.442695
    %v707 = vpow.pop %v706
    %v708 = vmul.f32 %v641, 1.442695
    %v709 = vpow.pop %v708
    %v710 = vmul.f32 %v642, 1.442695
    %v711 = vpow.pop %v710
    %v712 = vmul.f32 %v643, 1.442695
    %v713 = vpow.pop %v712
    %v714 = vmul.f32 %v644, 1.442695
    %v715 = vpow.pop %v714
    %v716 = vmul.f32 %v645, 1.442695
    %v717 = vpow.pop %v716
    %v718 = vmul.f32 %v646, 1.442695
    %v719 = vpow.pop %v718
    %v720 = vmul.f32 %v647, 1.442695
    %v721 = vpow.pop %v720
    %v722 = vmul.f32 %v648, 1.442695
    %v723 = vpow.pop %v722
    %v724 = vmul.f32 %v649, 1.442695
    %v725 = vpow.pop %v724
    %v726 = vmul.f32 %v650, 1.442695
    %v727 = vpow.pop %v726
    %v728 = vmul.f32 %v651, 1.442695
    %v729 = vpow.pop %v728
    %v730 = vmul.f32 %v652, 1.442695
    %v731 = vpow.pop %v730
    %v732 = vmul.f32 %v653, 1.442695
    %v733 = vpow.pop %v732
    %v734 = vmul.f32 %v654, 1.442695
    %v735 = vpow.pop %v734
    %v736 = vmul.f32 %v655, 1.442695
    %v737 = vpow.pop %v736
    %v738 = vmul.f32 %v656, 1.442695
    %v739 = vpow.pop %v738
    %v740 = vmul.f32 %v657, 1.442695
    %v741 = vpow.pop %v740
    %v742 = vmul.f32 %v658, 1.442695
    %v743 = vpow.pop %v742
    %v744 = vmul.f32 %v659, 1.442695
    %v745 = vpow.pop %v744
    %v746 = vmul.f32 %v660, 1.442695
    %v747 = vpow.pop %v746
    %v748 = vmul.f32 %v661, 1.442695
    %v749 = vpow.pop %v748
    %v750 = vmul.f32 %v662, 1.442695
    %v751 = vpow.pop %v750
    %v752 = vmul.f32 %v663, 1.442695
    %v753 = vpow.pop %v752
    %v754 = vmul.f32 %v664, 1.442695
    %v755 = vpow.pop %v754
    %v756 = vmul.f32 %v665, 1.442695
    %v757 = vpow.pop %v756
    %v758 = vmul.f32 %v666, 1.442695
    %v759 = vpow.pop %v758
    %v760 = vmul.f32 %v667, 1.442695
    %v761 = vpow.pop %v760
    %v762 = vmul.f32 %v668, 1.442695
    %v763 = vpow.pop %v762
    %v764 = vmul.f32 %v669, 1.442695
    %v765 = vpow.pop %v764
    %v766 = vmul.f32 %v670, 1.442695
    %v767 = vpow.pop %v766
    %v768 = vmul.f32 %v671, 1.442695
    %v769 = vpow.pop %v768
    %v770 = vmul.f32 %v672, 1.442695
    %v771 = vpow.pop %v770
    %v772 = vmul.f32 %v673, 1.442695
    %v773 = vpow.pop %v772
    %v774 = vmul.f32 %v674, 1.442695
    %v775 = vpow.pop %v774
    %v776 = vmul.f32 %v675, 1.442695
    %v777 = vpow.pop %v776
    %v778 = vmul.f32 %v676, 1.442695
    %v779 = vpow.pop %v778
    %v780 = vmul.f32 %v677, 1.442695
    %v781 = vpow.pop %v780
    %v782 = vmul.f32 %v678, 1.442695
    %v783 = vpow.pop %v782
    %v784 = vmul.f32 %v679, 1.442695
    %v785 = vpow.pop %v784
    %v786 = vmul.f32 %v680, 1.442695
    %v787 = vpow.pop %v786
    %v788 = vmul.f32 %v681, 1.442695
    %v789 = vpow.pop %v788
    %v790 = vmul.f32 %v682, 1.442695
    %v791 = vpow.pop %v790
    %v792 = vmul.f32 %v683, 1.442695
    %v793 = vpow.pop %v792
    %v794 = vmul.f32 %v684, 1.442695
    %v795 = vpow.pop %v794
    %v796 = vmul.f32 %v685, 1.442695
    %v797 = vpow.pop %v796
    %v798 = vmul.f32 %v686, 1.442695
    %v799 = vpow.pop %v798
    %v800 = vmul.f32 %v687, 1.442695
    %v801 = vpow.pop %v800
    %v802 = vmul.f32 %v688, 1.442695
    %v803 = vpow.pop %v802
    %v804 = vmul.f32 %v689, 1.442695
    %v805 = vpow.pop %v804
    %v806 = vmul.f32 %v690, 1.442695
    %v807 = vpow.pop %v806
    %v808 = vmul.f32 %v691, 1.442695
    %v809 = vpow.pop %v808
    %v810 = vmul.f32 %v692, 1.442695
    %v811 = vpow.pop %v810
    %v812 = vmul.f32 %v693, 1.442695
    %v813 = vpow.pop %v812
    %v814 = vmul.f32 %v694, 1.442695
    %v815 = vpow.pop %v814
    %v816 = vmul.f32 %v695, 1.442695
    %v817 = vpow.pop %v816
    %v818 = vmul.f32 %v696, 1.442695
    %v819 = vpow.pop %v818
    %v820 = vmul.f32 %v697, 1.442695
    %v821 = vpow.pop %v820
    %v822 = vmul.f32 %v698, 1.442695
    %v823 = vpow.pop %v822
    %v824 = vmul.f32 %v699, 1.442695
    %v825 = vpow.pop %v824
    %v826 = vmul.f32 %v700, 1.442695
    %v827 = vpow.pop %v826
    %v828 = vmul.f32 %v701, 1.442695
    %v829 = vpow.pop %v828
    %v830 = vadd.f32 %v703, 1.0
    %v831 = vadd.f32 %v705, 1.0
    %v832 = vadd.f32 %v707, 1.0
    %v833 = vadd.f32 %v709, 1.0
    %v834 = vadd.f32 %v711, 1.0
    %v835 = vadd.f32 %v713, 1.0
    %v836 = vadd.f32 %v715, 1.0
    %v837 = vadd.f32 %v717, 1.0
    %v838 = vadd.f32 %v719, 1.0
    %v839 = vadd.f32 %v721, 1.0
    %v840 = vadd.f32 %v723, 1.0
    %v841 = vadd.f32 %v725, 1.0
    %v842 = vadd.f32 %v727, 1.0
    %v843 = vadd.f32 %v729, 1.0
    %v844 = vadd.f32 %v731, 1.0
    %v845 = vadd.f32 %v733, 1.0
    %v846 = vadd.f32 %v735, 1.0
    %v847 = vadd.f32 %v737, 1.0
    %v848 = vadd.f32 %v739, 1.0
    %v849 = vadd.f32 %v741, 1.0
    %v850 = vadd.f32 %v743, 1.0
    %v851 = vadd.f32 %v745, 1.0
    %v852 = vadd.f32 %v747, 1.0
    %v853 = vadd.f32 %v749, 1.0
    %v854 = vadd.f32 %v751, 1.0
    %v855 = vadd.f32 %v753, 1.0
    %v856 = vadd.f32 %v755, 1.0
    %v857 = vadd.f32 %v757, 1.0
    %v858 = vadd.f32 %v759, 1.0
    %v859 = vadd.f32 %v761, 1.0
    %v860 = vadd.f32 %v763, 1.0
    %v861 = vadd.f32 %v765, 1.0
    %v862 = vadd.f32 %v767, 1.0
    %v863 = vadd.f32 %v769, 1.0
    %v864 = vadd.f32 %v771, 1.0
    %v865 = vadd.f32 %v773, 1.0
    %v866 = vadd.f32 %v775, 1.0
    %v867 = vadd.f32 %v777, 1.0
    %v868 = vadd.f32 %v779, 1.0
    %v869 = vadd.f32 %v781, 1.0
    %v870 = vadd.f32 %v783, 1.0
    %v871 = vadd.f32 %v785, 1.0
    %v872 = vadd.f32 %v787, 1.0
    %v873 = vadd.f32 %v789, 1.0
    %v874 = vadd.f32 %v791, 1.0
    %v875 = vadd.f32 %v793, 1.0
    %v876 = vadd.f32 %v795, 1.0
    %v877 = vadd.f32 %v797, 1.0
    %v878 = vadd.f32 %v799, 1.0
    %v879 = vadd.f32 %v801, 1.0
    %v880 = vadd.f32 %v803, 1.0
    %v881 = vadd.f32 %v805, 1.0
    %v882 = vadd.f32 %v807, 1.0
    %v883 = vadd.f32 %v809, 1.0
    %v884 = vadd.f32 %v811, 1.0
    %v885 = vadd.f32 %v813, 1.0
    %v886 = vadd.f32 %v815, 1.0
    %v887 = vadd.f32 %v817, 1.0
    %v888 = vadd.f32 %v819, 1.0
    %v889 = vadd.f32 %v821, 1.0
    %v890 = vadd.f32 %v823, 1.0
    %v891 = vadd.f32 %v825, 1.0
    %v892 = vadd.f32 %v827, 1.0
    %v893 = vadd.f32 %v829, 1.0
    %v894 = vrcp.pop %v830
    %v895 = vmul.f32 %v384, %v894
    %v896 = vrcp.pop %v831
    %v897 = vmul.f32 %v387, %v896
    %v898 = vrcp.pop %v832
    %v899 = vmul.f32 %v392, %v898
    %v900 = vrcp.pop %v833
    %v901 = vmul.f32 %v395, %v900
    %v902 = vrcp.pop %v834
    %v903 = vmul.f32 %v400, %v902
    %v904 = vrcp.pop %v835
    %v905 = vmul.f32 %v403, %v904
    %v906 = vrcp.pop %v836
    %v907 = vmul.f32 %v408, %v906
    %v908 = vrcp.pop %v837
    %v909 = vmul.f32 %v411, %v908
    %v910 = vrcp.pop %v838
    %v911 = vmul.f32 %v416, %v910
    %v912 = vrcp.pop %v839
    %v913 = vmul.f32 %v419, %v912
    %v914 = vrcp.pop %v840
    %v915 = vmul.f32 %v424, %v914
    %v916 = vrcp.pop %v841
    %v917 = vmul.f32 %v427, %v916
    %v918 = vrcp.pop %v842
    %v919 = vmul.f32 %v432, %v918
    %v920 = vrcp.pop %v843
    %v921 = vmul.f32 %v435, %v920
    %v922 = vrcp.pop %v844
    %v923 = vmul.f32 %v440, %v922
    %v924 = vrcp.pop %v845
    %v925 = vmul.f32 %v443, %v924
    %v926 = vrcp.pop %v846
    %v927 = vmul.f32 %v448, %v926
    %v928 = vrcp.pop %v847
    %v929 = vmul.f32 %v451, %v928
    %v930 = vrcp.pop %v848
    %v931 = vmul.f32 %v456, %v930
    %v932 = vrcp.pop %v849
    %v933 = vmul.f32 %v459, %v932
    %v934 = vrcp.pop %v850
    %v935 = vmul.f32 %v464, %v934
    %v936 = vrcp.pop %v851
    %v937 = vmul.f32 %v467, %v936
    %v938 = vrcp.pop %v852
    %v939 = vmul.f32 %v472, %v938
    %v940 = vrcp.pop %v853
    %v941 = vmul.f32 %v475, %v940
    %v942 = vrcp.pop %v854
    %v943 = vmul.f32 %v480, %v942
    %v944 = vrcp.pop %v855
    %v945 = vmul.f32 %v483, %v944
    %v946 = vrcp.pop %v856
    %v947 = vmul.f32 %v488, %v946
    %v948 = vrcp.pop %v857
    %v949 = vmul.f32 %v491, %v948
    %v950 = vrcp.pop %v858
    %v951 = vmul.f32 %v496, %v950
    %v952 = vrcp.pop %v859
    %v953 = vmul.f32 %v499, %v952
    %v954 = vrcp.pop %v860
    %v955 = vmul.f32 %v504, %v954
    %v956 = vrcp.pop %v861
    %v957 = vmul.f32 %v507, %v956
    %v958 = vrcp.pop %v862
    %v959 = vmul.f32 %v512, %v958
    %v960 = vrcp.pop %v863
    %v961 = vmul.f32 %v515, %v960
    %v962 = vrcp.pop %v864
    %v963 = vmul.f32 %v520, %v962
    %v964 = vrcp.pop %v865
    %v965 = vmul.f32 %v523, %v964
    %v966 = vrcp.pop %v866
    %v967 = vmul.f32 %v528, %v966
    %v968 = vrcp.pop %v867
    %v969 = vmul.f32 %v531, %v968
    %v970 = vrcp.pop %v868
    %v971 = vmul.f32 %v536, %v970
    %v972 = vrcp.pop %v869
    %v973 = vmul.f32 %v539, %v972
    %v974 = vrcp.pop %v870
    %v975 = vmul.f32 %v544, %v974
    %v976 = vrcp.pop %v871
    %v977 = vmul.f32 %v547, %v976
    %v978 = vrcp.pop %v872
    %v979 = vmul.f32 %v552, %v978
    %v980 = vrcp.pop %v873
    %v981 = vmul.f32 %v555, %v980
    %v982 = vrcp.pop %v874
    %v983 = vmul.f32 %v560, %v982
    %v984 = vrcp.pop %v875
    %v985 = vmul.f32 %v563, %v984
    %v986 = vrcp.pop %v876
    %v987 = vmul.f32 %v568, %v986
    %v988 = vrcp.pop %v877
    %v989 = vmul.f32 %v571, %v988
    %v990 = vrcp.pop %v878
    %v991 = vmul.f32 %v576, %v990
    %v992 = vrcp.pop %v879
    %v993 = vmul.f32 %v579, %v992
    %v994 = vrcp.pop %v880
    %v995 = vmul.f32 %v584, %v994
    %v996 = vrcp.pop %v881
    %v997 = vmul.f32 %v587, %v996
    %v998 = vrcp.pop %v882
    %v999 = vmul.f32 %v592, %v998
    %v1000 = vrcp.pop %v883
    %v1001 = vmul.f32 %v595, %v1000
    %v1002 = vrcp.pop %v884
    %v1003 = vmul.f32 %v600, %v1002
    %v1004 = vrcp.pop %v885
    %v1005 = vmul.f32 %v603, %v1004
    %v1006 = vrcp.pop %v886
    %v1007 = vmul.f32 %v608, %v1006
    %v1008 = vrcp.pop %v887
    %v1009 = vmul.f32 %v611, %v1008
    %v1010 = vrcp.pop %v888
    %v1011 = vmul.f32 %v616, %v1010
    %v1012 = vrcp.pop %v889
    %v1013 = vmul.f32 %v619, %v1012
    %v1014 = vrcp.pop %v890
    %v1015 = vmul.f32 %v624, %v1014
    %v1016 = vrcp.pop %v891
    %v1017 = vmul.f32 %v627, %v1016
    %v1018 = vrcp.pop %v892
    %v1019 = vmul.f32 %v632, %v1018
    %v1020 = vrcp.pop %v893
    %v1021 = vmul.f32 %v635, %v1020
    %1022 = vst [vmem:[#allocation2] sm:$0xff] %v895
    %1023 = vst [vmem:[#allocation2 + $0x8] sm:$0xff] %v897
    %1024 = vst [vmem:[#allocation2 + $0x10] sm:$0xff] %v899
    %1025 = vst [vmem:[#allocation2 + $0x18] sm:$0xff] %v901
    %1026 = vst [vmem:[#allocation2 + $0x20] sm:$0xff] %v903
    %1027 = vst [vmem:[#allocation2 + $0x28] sm:$0xff] %v905
    %1028 = vst [vmem:[#allocation2 + $0x30] sm:$0xff] %v907
    %1029 = vst [vmem:[#allocation2 + $0x38] sm:$0xff] %v909
    %1030 = vst [vmem:[#allocation2 + $0x40] sm:$0xff] %v911
    %1031 = vst [vmem:[#allocation2 + $0x48] sm:$0xff] %v913
    %1032 = vst [vmem:[#allocation2 + $0x50] sm:$0xff] %v915
    %1033 = vst [vmem:[#allocation2 + $0x58] sm:$0xff] %v917
    %1034 = vst [vmem:[#allocation2 + $0x60] sm:$0xff] %v919
    %1035 = vst [vmem:[#allocation2 + $0x68] sm:$0xff] %v921
    %1036 = vst [vmem:[#allocation2 + $0x70] sm:$0xff] %v923
    %1037 = vst [vmem:[#allocation2 + $0x78] sm:$0xff] %v925
    %1038 = vst [vmem:[#allocation2 + $0x80] sm:$0xff] %v927
    %1039 = vst [vmem:[#allocation2 + $0x88] sm:$0xff] %v929
    %1040 = vst [vmem:[#allocation2 + $0x90] sm:$0xff] %v931
    %1041 = vst [vmem:[#allocation2 + $0x98] sm:$0xff] %v933
    %1042 = vst [vmem:[#allocation2 + $0xa0] sm:$0xff] %v935
    %1043 = vst [vmem:[#allocation2 + $0xa8] sm:$0xff] %v937
    %1044 = vst [vmem:[#allocation2 + $0xb0] sm:$0xff] %v939
    %1045 = vst [vmem:[#allocation2 + $0xb8] sm:$0xff] %v941
    %1046 = vst [vmem:[#allocation2 + $0xc0] sm:$0xff] %v943
    %1047 = vst [vmem:[#allocation2 + $0xc8] sm:$0xff] %v945
    %1048 = vst [vmem:[#allocation2 + $0xd0] sm:$0xff] %v947
    %1049 = vst [vmem:[#allocation2 + $0xd8] sm:$0xff] %v949
    %1050 = vst [vmem:[#allocation2 + $0xe0] sm:$0xff] %v951
    %1051 = vst [vmem:[#allocation2 + $0xe8] sm:$0xff] %v953
    %1052 = vst [vmem:[#allocation2 + $0xf0] sm:$0xff] %v955
    %1053 = vst [vmem:[#allocation2 + $0xf8] sm:$0xff] %v957
    %1054 = vst [vmem:[#allocation2 + $0x100] sm:$0xff] %v959
    %1055 = vst [vmem:[#allocation2 + $0x108] sm:$0xff] %v961
    %1056 = vst [vmem:[#allocation2 + $0x110] sm:$0xff] %v963
    %1057 = vst [vmem:[#allocation2 + $0x118] sm:$0xff] %v965
    %1058 = vst [vmem:[#allocation2 + $0x120] sm:$0xff] %v967
    %1059 = vst [vmem:[#allocation2 + $0x128] sm:$0xff] %v969
    %1060 = vst [vmem:[#allocation2 + $0x130] sm:$0xff] %v971
    %1061 = vst [vmem:[#allocation2 + $0x138] sm:$0xff] %v973
    %1062 = vst [vmem:[#allocation2 + $0x140] sm:$0xff] %v975
    %1063 = vst [vmem:[#allocation2 + $0x148] sm:$0xff] %v977
    %1064 = vst [vmem:[#allocation2 + $0x150] sm:$0xff] %v979
    %1065 = vst [vmem:[#allocation2 + $0x158] sm:$0xff] %v981
    %1066 = vst [vmem:[#allocation2 + $0x160] sm:$0xff] %v983
    %1067 = vst [vmem:[#allocation2 + $0x168] sm:$0xff] %v985
    %1068 = vst [vmem:[#allocation2 + $0x170] sm:$0xff] %v987
    %1069 = vst [vmem:[#allocation2 + $0x178] sm:$0xff] %v989
    %1070 = vst [vmem:[#allocation2 + $0x180] sm:$0xff] %v991
    %1071 = vst [vmem:[#allocation2 + $0x188] sm:$0xff] %v993
    %1072 = vst [vmem:[#allocation2 + $0x190] sm:$0xff] %v995
    %1073 = vst [vmem:[#allocation2 + $0x198] sm:$0xff] %v997
    %1074 = vst [vmem:[#allocation2 + $0x1a0] sm:$0xff] %v999
    %1075 = vst [vmem:[#allocation2 + $0x1a8] sm:$0xff] %v1001
    %1076 = vst [vmem:[#allocation2 + $0x1b0] sm:$0xff] %v1003
    %1077 = vst [vmem:[#allocation2 + $0x1b8] sm:$0xff] %v1005
    %1078 = vst [vmem:[#allocation2 + $0x1c0] sm:$0xff] %v1007
    %1079 = vst [vmem:[#allocation2 + $0x1c8] sm:$0xff] %v1009
    %1080 = vst [vmem:[#allocation2 + $0x1d0] sm:$0xff] %v1011
    %1081 = vst [vmem:[#allocation2 + $0x1d8] sm:$0xff] %v1013
    %1082 = vst [vmem:[#allocation2 + $0x1e0] sm:$0xff] %v1015
    %1083 = vst [vmem:[#allocation2 + $0x1e8] sm:$0xff] %v1017
    %1084 = vst [vmem:[#allocation2 + $0x1f0] sm:$0xff] %v1019
    %1085 = vst [vmem:[#allocation2 + $0x1f8] sm:$0xff] %v1021
    // Predicated region
    $region14: #{tpu_custom_call.1} parent=1 // pred_check
      _
    $region15: #{tpu_custom_call.1} parent=1 // pred_check_branch
      %1087 = sbr.rel (0) target = $region17
    $region16: #{tpu_custom_call.1} parent=1 // pred_region
      %s1089 = ssub.s32 8192, 8192
      %1090 = vsyncadd [#allocation3], %s1089
      %s1091 = sshll.u32 [#allocation2], 4
      %s1092 = int_to_ptr.vmem [resolvable:$true] %s1091
      %1097 = dma.vmem_to_hbm [thread:$0]  %s1092, 8192, %s3, [#allocation3], 128, 128, 8
    $region17: #{tpu_custom_call.1} parent=1 // pred_fallthru
      _
    // Predicated region
    $region18: #{tpu_custom_call.1} parent=1 // pred_check
      _
    $region19: #{tpu_custom_call.1} parent=1 // pred_check_branch
      %1099 = sbr.rel (0) target = $region21
    $region20: #{tpu_custom_call.1} parent=1 // pred_region
      %1100 = dma.done [#allocation3], 8192
    $region21: #{tpu_custom_call.1} parent=1 // pred_fallthru
      _
    %1101 = vsyncpa [#allocation3], 1

</llo_original>
